<compile_context>
chip_gen: v6e
topology: v6e:2x2x1
jax: 0.10.0
libtpu: 0.0.40
codegen_flags: <defaults>
</compile_context>

<pallas_src>
import functools

import jax
import jax.numpy as jnp
from jax import lax
from jax.experimental import pallas as pl
from jax.experimental.pallas import tpu as pltpu

EPS = 1e-07
_VMEM_TILE_BUDGET = 12 * 1024 * 1024   # stays under v5e's 16 MiB scoped default


def _jacc_stats_kernel(x_ref, lab_ref, out_ref, *, num_valid, pixel_tile,
                       tiles_per_super, needs_mask):
    """Grid step = (batch b, pixel super-chunk s, pixel tile t).

    x_ref   : (1, C, Pt)  logits tile (native dtype, upcast in-register)
    lab_ref : (1, 1, Pt)  i32 labels tile
    out_ref : (1, 1, C, 128) f32 accumulator; lanes 0/1/2 hold
              intersection / sum(probas) / sum(one_hot); lanes 3.. stay zero.
    """
    si = pl.program_id(1)
    ti = pl.program_id(2)

    @pl.when(ti == 0)
    def _init():
        out_ref[...] = jnp.zeros_like(out_ref)

    x = x_ref[0].astype(jnp.float32)          # (C, Pt), in-register upcast
    lab = lab_ref[0]                          # (1, Pt) i32
    c = x.shape[0]

    if needs_mask:
        # Partial / phantom edge blocks contain garbage lanes: mask logits
        # before exp (Inf/NaN safety) and zero their probas / one-hot.
        offset = (si * tiles_per_super + ti) * pixel_tile
        lane = lax.broadcasted_iota(jnp.int32, (1, pixel_tile), 1)
        valid = (offset + lane) < num_valid   # (1, Pt) bool
        valid_f = valid.astype(jnp.float32)
        x = jnp.where(valid, x, 0.0)
        hot_one = valid_f
    else:
        hot_one = 1.0

    # Softmax over the channel (sublane) axis; divide via the EUP reciprocal.
    m = jnp.max(x, axis=0, keepdims=True)                      # (1, Pt)
    e = jnp.exp(x - m)                                         # (C, Pt)
    inv = pl.reciprocal(jnp.sum(e, axis=0, keepdims=True), approx=True)
    probas = e * inv                                           # (C, Pt)
    if needs_mask:
        probas = probas * valid_f

    # One-hot built in-kernel from integer labels (no HBM one-hot tensor).
    cls = lax.broadcasted_iota(jnp.int32, (c, pixel_tile), 0)
    one_hot = jnp.where(lab == cls, hot_one, 0.0)              # (C, Pt)

    inter = jnp.sum(probas * one_hot, axis=1, keepdims=True)   # (C, 1)
    psum = jnp.sum(probas, axis=1, keepdims=True)              # (C, 1)
    tsum = jnp.sum(one_hot, axis=1, keepdims=True)             # (C, 1)

    # Lane-dense (C, 128) partial: lanes 0/1/2 carry the stats, rest zero.
    col = lax.broadcasted_iota(jnp.int32, (c, 128), 1)
    stats = (jnp.where(col == 0, inter, 0.0)
             + jnp.where(col == 1, psum, 0.0)
             + jnp.where(col == 2, tsum, 0.0))                 # (C, 128)

    out_ref[...] += stats[None, None]


def _pick_pixel_tile(c, x_itemsize):
    """Largest 128-multiple pixel tile keeping double-buffered input tiles plus
    ~8 live f32 (C_pad, Pt) compiler temporaries under the VMEM budget
    (C pads to 8 sublanes in VMEM)."""
    c_pad = ((c + 7) // 8) * 8
    bytes_per_pixel = 2 * (c_pad * x_itemsize + 4) + 8 * c_pad * 4
    cap = (_VMEM_TILE_BUDGET // bytes_per_pixel) // 128 * 128
    return int(max(512, min(cap, 65536)))


def mod_jaccard_loss(logits, true, class_weights=None, eps=EPS,
                     pixel_tile_cap=None):
    """JAX/Pallas equivalent of the PyTorch mod_jaccard_loss forward pass.

    logits: (B, C, H, W).  true: (B, 1, H, W) (or (B, H, W)) integer labels.
    """
    b, c, h, w = logits.shape
    p = h * w

    # Native-dtype logits (no wrapper f32 cast / copy); labels as int32.
    x = logits.reshape(b, c, p)
    lab2 = true[:, 0] if true.ndim == 4 else true            # torch: true.squeeze(1)
    lab = lab2.astype(jnp.int32).reshape(b, 1, p)

    cap = pixel_tile_cap if pixel_tile_cap is not None else _pick_pixel_tile(
        c, jnp.dtype(x.dtype).itemsize)
    if p <= cap:
        pt, n_tiles = p, 1
    else:
        pt = max(128, (cap // 128) * 128)
        n_tiles = pl.cdiv(p, pt)

    # v7x megacore: give both TensorCores work when the batch axis alone can't.
    n_super = 2 if (b % 2 == 1 and n_tiles >= 2) else 1
    tiles_per_super = pl.cdiv(n_tiles, n_super)
    phantom = n_super * tiles_per_super > n_tiles
    needs_mask = (p % pt != 0) or phantom
    last_block = n_tiles - 1

    def _pix_block(si, ti):
        t = si * tiles_per_super + ti
        if phantom:                                           # static decision
            t = jnp.minimum(t, last_block)                    # clamp phantom tiles
        return t

    kernel = functools.partial(_jacc_stats_kernel, num_valid=p, pixel_tile=pt,
                               tiles_per_super=tiles_per_super,
                               needs_mask=needs_mask)

    cost = pl.CostEstimate(
        flops=int(12 * b * c * p),
        transcendentals=int(b * c * p),
        bytes_accessed=int(b * c * p * jnp.dtype(x.dtype).itemsize
                           + b * p * 4 + b * n_super * c * 128 * 4),
    )

    stats = pl.pallas_call(
        kernel,
        out_shape=jax.ShapeDtypeStruct((b, n_super, c, 128), jnp.float32),
        grid_spec=pltpu.PrefetchScalarGridSpec(
            num_scalar_prefetch=0,
            grid=(b, n_super, tiles_per_super),               # reduction axis last
            in_specs=[
                pl.BlockSpec((1, c, pt), lambda bi, si, ti: (bi, 0, _pix_block(si, ti))),
                pl.BlockSpec((1, 1, pt), lambda bi, si, ti: (bi, 0, _pix_block(si, ti))),
            ],
            out_specs=pl.BlockSpec((1, 1, c, 128), lambda bi, si, ti: (bi, si, 0, 0)),
        ),
        compiler_params=pltpu.CompilerParams(
            dimension_semantics=("parallel", "parallel", "arbitrary"),
            vmem_limit_bytes=32 * 1024 * 1024),
        cost_estimate=cost,
    )(x, lab)

    per_class = jnp.sum(stats[..., :3], axis=(0, 1))          # (C, 3)
    intersection = per_class[:, 0]
    probas_sum = per_class[:, 1]
    true_sum = per_class[:, 2]

    cardinality = probas_sum + true_sum
    union = cardinality - intersection
    tp = intersection
    fp = cardinality - intersection
    fn = true_sum - intersection
    # TODO(synk): TN = sum(probas == 0) is computed by the reference but never
    # affects the returned loss (dead code), so it is not materialized here.

    if class_weights is not None:
        # NOTE: mirrors the PyTorch quirk — (C,) * (1,C,1,1) broadcasts to an
        # outer product (1,C,1,C), not per-class scaling, exactly as in torch.
        wts = jnp.asarray(class_weights, dtype=jnp.float32).reshape(1, c, 1, 1)
        tp = tp * wts
        fp = fp * wts
        fn = fn * wts

    tp_sum = jnp.sum(tp)
    fp_sum = jnp.sum(fp)
    # reference: if tp_sum.item()==0 or fp_sum.item()==0 -> xi = 1.0
    safe_tp = jnp.where(tp_sum == 0, 1.0, tp_sum)
    xi = jnp.where((tp_sum == 0) | (fp_sum == 0), 1.0, fp_sum / safe_tp)

    weighted_intersection = tp / (tp + jnp.abs(xi) * (fp + fn) + eps)
    jacc_loss = jnp.sum(weighted_intersection * union) / (jnp.sum(union) + eps)
    return 1.0 - jacc_loss


def _mod_jaccard_loss_ref(logits, true, eps=EPS):
    """Pure-JAX reference (mirrors the PyTorch code, class_weights=None)."""
    num_classes = logits.shape[1]
    lab = true[:, 0] if true.ndim == 4 else true
    one_hot = jnp.transpose(jax.nn.one_hot(lab, num_classes, dtype=jnp.float32),
                            (0, 3, 1, 2))
    probas = jax.nn.softmax(logits.astype(jnp.float32), axis=1)
    intersection = jnp.sum(probas * one_hot, axis=(0, 2, 3))
    cardinality = jnp.sum(probas + one_hot, axis=(0, 2, 3))
    union = cardinality - intersection
    tp = intersection
    fp = cardinality - intersection
    fn = jnp.sum(one_hot, axis=(0, 2, 3)) - intersection
    tp_sum = jnp.sum(tp)
    fp_sum = jnp.sum(fp)
    xi = jnp.where((tp_sum == 0) | (fp_sum == 0), 1.0,
                   fp_sum / jnp.where(tp_sum == 0, 1.0, tp_sum))
    wi = tp / (tp + jnp.abs(xi) * (fp + fn) + eps)
    jacc = jnp.sum(wi * union) / (jnp.sum(union) + eps)
    return 1.0 - jacc


if __name__ == "__main__":
    key = jax.random.PRNGKey(0)
    k1, k2, k3, k4 = jax.random.split(key, 4)

    # Main check: B=2, C=4, H=W=16 (single full-extent pixel tile per batch).
    B, C, H, W = 2, 4, 16, 16
    logits = jax.random.normal(k1, (B, C, H, W), dtype=jnp.float32)
    true = jax.random.randint(k2, (B, 1, H, W), 0, C, dtype=jnp.int32)
    loss = jax.block_until_ready(mod_jaccard_loss(logits, true))
    ref = _mod_jaccard_loss_ref(logits, true)
    assert abs(float(loss) - float(ref)) < 5e-3, (float(loss), float(ref))

    # Second check: exercises the tiled / masked / B==1 two-super-chunk path
    # (pt=128, 3 real tiles + 1 phantom tile, no wrapper padding).
    logits2 = jax.random.normal(k3, (1, 4, 16, 24), dtype=jnp.float32)
    true2 = jax.random.randint(k4, (1, 1, 16, 24), 0, 4, dtype=jnp.int32)
    loss2 = jax.block_until_ready(mod_jaccard_loss(logits2, true2, pixel_tile_cap=128))
    ref2 = _mod_jaccard_loss_ref(logits2, true2)
    assert abs(float(loss2) - float(ref2)) < 5e-3, (float(loss2), float(ref2))

    print("KERNEL_OK")
</pallas_src>

<mosaic_0001>
module attributes {stable_mosaic.version = 11 : i64} {
  func.func @_jacc_stats_kernel(%arg0: i32, %arg1: i32, %arg2: i32, %arg3: memref<1x4x256xf32, #tpu.memory_space<vmem>>, %arg4: memref<1x1x256xi32, #tpu.memory_space<vmem>>, %arg5: memref<1x1x4x128xf32, #tpu.memory_space<vmem>>) attributes {dimension_semantics = [#tpu.dimension_semantics<parallel>, #tpu.dimension_semantics<parallel>, #tpu.dimension_semantics<arbitrary>], iteration_bounds = array<i64: 2, 1, 1>, scalar_prefetch = 0 : i64, scratch_operands = 0 : i64, tpu.core_type = #tpu.core_type<tc>, window_params = [{transform_indices = @transform_0, window_bounds = array<i64: 1, 4, 256>}, {transform_indices = @transform_1, window_bounds = array<i64: 1, 1, 256>}, {transform_indices = @transform_2, window_bounds = array<i64: 1, 1, 4, 128>}]} {
    %c0_i32 = arith.constant 0 : i32
    %0 = arith.cmpi eq, %arg2, %c0_i32 : i32
    %1 = arith.extui %0 : i1 to i32
    %c0_i32_0 = arith.constant 0 : i32
    %2 = arith.cmpi ne, %1, %c0_i32_0 : i32
    scf.if %2 {
      %cst_24 = arith.constant 0.000000e+00 : f32
      %55 = vector.broadcast %cst_24 : f32 to vector<1x1x4x128xf32>
      %c0_25 = arith.constant 0 : index
      %c0_26 = arith.constant 0 : index
      %c0_27 = arith.constant 0 : index
      %c0_28 = arith.constant 0 : index
      %56 = vector.load %arg5[%c0_25, %c0_26, %c0_27, %c0_28] : memref<1x1x4x128xf32, #tpu.memory_space<vmem>>, vector<1x1x4x128xf32>
      tpu.vector_store %arg5[%c0_25, %c0_26, %c0_27, %c0_28], %55 {strides = array<i32>} : memref<1x1x4x128xf32, #tpu.memory_space<vmem>>, vector<1x1x4x128xf32>,
    } else {
    }
    %c0 = arith.constant 0 : index
    %c0_1 = arith.constant 0 : index
    %c0_2 = arith.constant 0 : index
    %3 = vector.load %arg3[%c0, %c0_1, %c0_2] : memref<1x4x256xf32, #tpu.memory_space<vmem>>, vector<1x4x256xf32>
    %4 = vector.shape_cast %3 : vector<1x4x256xf32> to vector<4x256xf32>
    %c0_3 = arith.constant 0 : index
    %c0_4 = arith.constant 0 : index
    %c0_5 = arith.constant 0 : index
    %5 = vector.load %arg4[%c0_3, %c0_4, %c0_5] : memref<1x1x256xi32, #tpu.memory_space<vmem>>, vector<1x1x256xi32>
    %6 = vector.shape_cast %5 : vector<1x1x256xi32> to vector<1x256xi32>
    %cst = arith.constant dense<0xFF800000> : vector<256xf32>
    %7 = vector.multi_reduction <maximumf>, %4, %cst [0] : vector<4x256xf32> to vector<256xf32>
    %8 = vector.shape_cast %7 : vector<256xf32> to vector<1x256xf32>
    %9 = vector.broadcast %8 : vector<1x256xf32> to vector<4x256xf32>
    %10 = arith.subf %4, %9 : vector<4x256xf32>
    %11 = math.exp %10 : vector<4x256xf32>
    %cst_6 = arith.constant dense<0.000000e+00> : vector<256xf32>
    %12 = vector.multi_reduction <add>, %11, %cst_6 [0] : vector<4x256xf32> to vector<256xf32>
    %13 = vector.shape_cast %12 : vector<256xf32> to vector<1x256xf32>
    %14 = tpu.reciprocal %13 {approx = true} : vector<1x256xf32> -> vector<1x256xf32>
    %15 = vector.broadcast %14 : vector<1x256xf32> to vector<4x256xf32>
    %16 = arith.mulf %11, %15 : vector<4x256xf32>
    %17 = tpu.iota {dimensions = array<i32: 0>} : vector<4x256xi32>
    %18 = vector.broadcast %6 : vector<1x256xi32> to vector<4x256xi32>
    %19 = arith.cmpi eq, %18, %17 : vector<4x256xi32>
    %cst_7 = arith.constant 1.000000e+00 : f32
    %cst_8 = arith.constant 0.000000e+00 : f32
    %20 = vector.broadcast %cst_7 : f32 to vector<4x256xf32>
    %21 = vector.broadcast %cst_8 : f32 to vector<4x256xf32>
    %22 = arith.select %19, %20, %21 : vector<4x256xi1>, vector<4x256xf32>
    %23 = arith.mulf %16, %22 : vector<4x256xf32>
    %cst_9 = arith.constant dense<0.000000e+00> : vector<4xf32>
    %24 = vector.multi_reduction <add>, %23, %cst_9 [1] : vector<4x256xf32> to vector<4xf32>
    %25 = vector.shape_cast %24 : vector<4xf32> to vector<4x1xf32>
    %cst_10 = arith.constant dense<0.000000e+00> : vector<4xf32>
    %26 = vector.multi_reduction <add>, %16, %cst_10 [1] : vector<4x256xf32> to vector<4xf32>
    %27 = vector.shape_cast %26 : vector<4xf32> to vector<4x1xf32>
    %cst_11 = arith.constant dense<0.000000e+00> : vector<4xf32>
    %28 = vector.multi_reduction <add>, %22, %cst_11 [1] : vector<4x256xf32> to vector<4xf32>
    %29 = vector.shape_cast %28 : vector<4xf32> to vector<4x1xf32>
    %30 = tpu.iota {dimensions = array<i32: 1>} : vector<4x128xi32>
    %c0_i32_12 = arith.constant 0 : i32
    %31 = vector.broadcast %c0_i32_12 : i32 to vector<4x128xi32>
    %32 = arith.cmpi eq, %30, %31 : vector<4x128xi32>
    %cst_13 = arith.constant 0.000000e+00 : f32
    %33 = vector.shape_cast %25 : vector<4x1xf32> to vector<4x1xf32>
    %34 = vector.broadcast %33 : vector<4x1xf32> to vector<4x128xf32>
    %35 = vector.broadcast %cst_13 : f32 to vector<4x128xf32>
    %36 = arith.select %32, %34, %35 : vector<4x128xi1>, vector<4x128xf32>
    %c1_i32 = arith.constant 1 : i32
    %37 = vector.broadcast %c1_i32 : i32 to vector<4x128xi32>
    %38 = arith.cmpi eq, %30, %37 : vector<4x128xi32>
    %cst_14 = arith.constant 0.000000e+00 : f32
    %39 = vector.shape_cast %27 : vector<4x1xf32> to vector<4x1xf32>
    %40 = vector.broadcast %39 : vector<4x1xf32> to vector<4x128xf32>
    %41 = vector.broadcast %cst_14 : f32 to vector<4x128xf32>
    %42 = arith.select %38, %40, %41 : vector<4x128xi1>, vector<4x128xf32>
    %43 = arith.addf %36, %42 : vector<4x128xf32>
    %c2_i32 = arith.constant 2 : i32
    %44 = vector.broadcast %c2_i32 : i32 to vector<4x128xi32>
    %45 = arith.cmpi eq, %30, %44 : vector<4x128xi32>
    %cst_15 = arith.constant 0.000000e+00 : f32
    %46 = vector.shape_cast %29 : vector<4x1xf32> to vector<4x1xf32>
    %47 = vector.broadcast %46 : vector<4x1xf32> to vector<4x128xf32>
    %48 = vector.broadcast %cst_15 : f32 to vector<4x128xf32>
    %49 = arith.select %45, %47, %48 : vector<4x128xi1>, vector<4x128xf32>
    %50 = arith.addf %43, %49 : vector<4x128xf32>
    %c0_16 = arith.constant 0 : index
    %c0_17 = arith.constant 0 : index
    %c0_18 = arith.constant 0 : index
    %c0_19 = arith.constant 0 : index
    %51 = vector.load %arg5[%c0_16, %c0_17, %c0_18, %c0_19] : memref<1x1x4x128xf32, #tpu.memory_space<vmem>>, vector<1x1x4x128xf32>
    %52 = vector.shape_cast %50 : vector<4x128xf32> to vector<1x1x4x128xf32>
    %53 = arith.addf %51, %52 : vector<1x1x4x128xf32>
    %c0_20 = arith.constant 0 : index
    %c0_21 = arith.constant 0 : index
    %c0_22 = arith.constant 0 : index
    %c0_23 = arith.constant 0 : index
    %54 = vector.load %arg5[%c0_20, %c0_21, %c0_22, %c0_23] : memref<1x1x4x128xf32, #tpu.memory_space<vmem>>, vector<1x1x4x128xf32>
    tpu.vector_store %arg5[%c0_20, %c0_21, %c0_22, %c0_23], %53 {strides = array<i32>} : memref<1x1x4x128xf32, #tpu.memory_space<vmem>>, vector<1x1x4x128xf32>,
    return
  }
  func.func @transform_0(%arg0: i32, %arg1: i32, %arg2: i32) -> (i32, i32, i32) {
    %c1_i32 = arith.constant 1 : i32
    %0 = arith.muli %arg1, %c1_i32 : i32
    %1 = arith.addi %0, %arg2 : i32
    %c0_i32 = arith.constant 0 : i32
    %c0_i32_0 = arith.constant 0 : i32
    return %arg0, %c0_i32, %1 : i32, i32, i32
  }
  func.func @transform_1(%arg0: i32, %arg1: i32, %arg2: i32) -> (i32, i32, i32) {
    %c1_i32 = arith.constant 1 : i32
    %0 = arith.muli %arg1, %c1_i32 : i32
    %1 = arith.addi %0, %arg2 : i32
    %c0_i32 = arith.constant 0 : i32
    %c0_i32_0 = arith.constant 0 : i32
    return %arg0, %c0_i32, %1 : i32, i32, i32
  }
  func.func @transform_2(%arg0: i32, %arg1: i32, %arg2: i32) -> (i32, i32, i32, i32) {
    %c0_i32 = arith.constant 0 : i32
    %c0_i32_0 = arith.constant 0 : i32
    %c0_i32_1 = arith.constant 0 : i32
    return %arg0, %arg1, %c0_i32, %c0_i32_0 : i32, i32, i32, i32
  }
}

</mosaic_0001>

<llo_original>
// kernel: tpu_custom_call.1
$region0: #{tpu_custom_call.1}
  #allocation0 [shape = 'u32[]', space=smem, size = 0x4, offset = 0x4, fixed_abs, tag = 'smem constant byte address 0x4 - core index']
  #allocation1 [shape = 'u32[144,128]{1,0:T(1,128)}', space=vmem, size = 0x12000, scoped, tag = 'internal scratch']
  %s0 = inlined_call_operand.hbm [shape: f32[2,4,256], index: 0, kind: input, shape index: {}]
  %s1 = inlined_call_operand.hbm [shape: s32[2,1,256], index: 1, kind: input, shape index: {}]
  %s2 = inlined_call_operand.hbm [shape: f32[2,1,4,128], index: 2, kind: output, shape index: {}]
  %s3 = sld [smem:[#allocation0]]
  $region53: #{tpu_custom_call.1} parent=0
    _
  %s5 = ssub.s32 1, %s3
  %s6 = scalar_select 0, %s5, %s3
  $region1: #{tpu_custom_call.1} parent=0
    #allocation2 [shape = 'u8[8192]{0}', space=vmem, size = 0x2000, scoped, tag = 'input window, operand 0']
    #allocation3 [shape = 's32[2]{0}', space=sflag, size = 0x8, scoped, tag = 'scoped memory for tpu_custom_call.1']
    #allocation4 [shape = 's32[2]{0}', space=sflag, size = 0x8, scoped, tag = 'scoped memory for tpu_custom_call.1']
    #allocation5 [shape = 'u8[2048]{0}', space=vmem, size = 0x800, scoped, tag = 'input window, operand 1']
    #allocation6 [shape = 's32[2]{0}', space=sflag, size = 0x8, scoped, tag = 'scoped memory for tpu_custom_call.1']
    #allocation7 [shape = 'u8[4096]{0}', space=vmem, size = 0x1000, scoped, tag = 'output window, operand 0']
    %7 = vsyncpa [#allocation3], 0
    %s8 = scalar_lea.sflag [#allocation3], 1
    %9 = vsyncpa %s8, 0
    %10 = vsyncpa [#allocation6], 0
    %s11 = scalar_lea.sflag [#allocation6], 1
    %12 = vsyncpa %s11, 0
    %13 = vsyncpa [#allocation4], 0
    %s14 = scalar_lea.sflag [#allocation4], 1
    %15 = vsyncpa %s14, 0
    loop: start=0, step=1, limit=4
    $region2: #{tpu_custom_call.1} parent=1 // loop_pre_header
      _
    $region3: #{tpu_custom_call.1} parent=1 // loop_header
      %s17 = sphi 0, %s21
      %p18 = scmp.ge.s32.totalorder %s17, 4
      %s24 = sphi 0, %s43
      %s25 = sphi 0, %s39
      %s26 = sphi 0, %s35
      %s27 = sphi 0, %s24
      %s28 = sphi 0, %s25
      %s29 = sphi 0, %s26
      %s30 = sphi 0, %s27
      %s31 = sphi 0, %s28
      %s32 = sphi 0, %s29
      %s50 = sphi 0, %s52
      %s53 = sphi 0, %s50
      %s54 = sphi 0, %s53
      %s70 = sphi 0, %s54
      %s80 = sphi 0, %s82
      %s83 = sphi 0, %s80
      %s84 = sphi 0, %s83
      %s100 = sphi 0, %s84
      %s108 = sphi 0, %s110
      %s111 = sphi 0, %s108
      %s112 = sphi 0, %s111
      %s128 = sphi 0, %s112
    $region4: #{tpu_custom_call.1} parent=1 // loop_header_branch
      %20 = sbr.rel (%p18) target = $region8
    $region5: #{tpu_custom_call.1} parent=1 // loop_body
      %s22 = ssub.s32 %s17, 1
      %s23 = ssub.s32 %s17, 2
      %s33 = sadd.s32 1, %s26
      %p34 = scmp.ge.s32.totalorder %s33, 1
      %s35 = scalar_select %p34, 0, %s33
      %s36 = sadd.s32 1, %s25
      %s37 = scalar_select %p34, %s36, %s25
      %p38 = scmp.ge.s32.totalorder %s37, 1
      %s39 = scalar_select %p38, 0, %s37
      %s40 = sadd.s32 1, %s24
      %s41 = scalar_select %p38, %s40, %s24
      %p42 = scmp.ge.s32.totalorder %s41, 2
      %s43 = scalar_select %p42, 0, %s41
      %s44 = sadd.s32 %s25, %s26
      %s45 = sadd.s32 %s39, %s35
      %s46 = ssub.s32 %s24, %s43
      %s47 = ssub.s32 %s44, %s45
      %s48 = sor.u32 %s46, %s47
      %p49 = scmp.eq.s32.totalorder %s48, 0
      %s51 = sadd.s32 %s50, 1
      %s52 = scalar_select %p49, %s50, %s51
      %p55 = pneg %p49
      %p56 = scmp.eq.s32.totalorder %s17, 1
      %p57 = por %p55, %p56
      %p58 = scmp.ne.s32.totalorder %s50, %s53
      %p59 = scmp.eq.s32.totalorder %s17, 0
      %p60 = por %p58, %p59
      %p61 = scmp.ne.s32.totalorder %s50, %s53
      %p62 = scmp.eq.s32.totalorder %s22, 1
      %p63 = por %p61, %p62
      %p64 = scmp.ne.s32.totalorder %s53, %s54
      %p65 = scmp.eq.s32.totalorder %s22, 0
      %p66 = por %p64, %p65
      %p67 = scmp.ne.s32.totalorder %s53, %s54
      %p68 = scmp.eq.s32.totalorder %s23, 1
      %p69 = por %p67, %p68
      %p71 = scmp.ne.s32.totalorder %s54, %s70
      %p72 = scmp.eq.s32.totalorder %s23, 0
      %p73 = por %p71, %p72
      %s74 = sadd.s32 %s25, %s26
      %s75 = sadd.s32 %s39, %s35
      %s76 = ssub.s32 %s24, %s43
      %s77 = ssub.s32 %s74, %s75
      %s78 = sor.u32 %s76, %s77
      %p79 = scmp.eq.s32.totalorder %s78, 0
      %s81 = sadd.s32 %s80, 1
      %s82 = scalar_select %p79, %s80, %s81
      %p85 = pneg %p79
      %p86 = scmp.eq.s32.totalorder %s17, 1
      %p87 = por %p85, %p86
      %p88 = scmp.ne.s32.totalorder %s80, %s83
      %p89 = scmp.eq.s32.totalorder %s17, 0
      %p90 = por %p88, %p89
      %p91 = scmp.ne.s32.totalorder %s80, %s83
      %p92 = scmp.eq.s32.totalorder %s22, 1
      %p93 = por %p91, %p92
      %p94 = scmp.ne.s32.totalorder %s83, %s84
      %p95 = scmp.eq.s32.totalorder %s22, 0
      %p96 = por %p94, %p95
      %p97 = scmp.ne.s32.totalorder %s83, %s84
      %p98 = scmp.eq.s32.totalorder %s23, 1
      %p99 = por %p97, %p98
      %p101 = scmp.ne.s32.totalorder %s84, %s100
      %p102 = scmp.eq.s32.totalorder %s23, 0
      %p103 = por %p101, %p102
      %s104 = ssub.s32 %s24, %s43
      %s105 = ssub.s32 %s25, %s39
      %s106 = sor.u32 %s104, %s105
      %p107 = scmp.eq.s32.totalorder %s106, 0
      %s109 = sadd.s32 %s108, 1
      %s110 = scalar_select %p107, %s108, %s109
      %p113 = pneg %p107
      %p114 = scmp.eq.s32.totalorder %s17, 1
      %p115 = por %p113, %p114
      %p116 = scmp.ne.s32.totalorder %s108, %s111
      %p117 = scmp.eq.s32.totalorder %s17, 0
      %p118 = por %p116, %p117
      %p119 = scmp.ne.s32.totalorder %s108, %s111
      %p120 = scmp.eq.s32.totalorder %s22, 1
      %p121 = por %p119, %p120
      %p122 = scmp.ne.s32.totalorder %s111, %s112
      %p123 = scmp.eq.s32.totalorder %s22, 0
      %p124 = por %p122, %p123
      %p125 = scmp.ne.s32.totalorder %s111, %s112
      %p126 = scmp.eq.s32.totalorder %s23, 1
      %p127 = por %p125, %p126
      %p129 = scmp.ne.s32.totalorder %s112, %s128
      %p130 = scmp.eq.s32.totalorder %s23, 0
      %p131 = por %p129, %p130
      %p132 = scmp.le.s32.totalorder 1, %s17
      %p133 = scmp.lt.s32.totalorder %s17, 3
      %p134 = pnand %p132, %p133
      %p135 = pneg %p134
      // Predicated region
      $region9: #{tpu_custom_call.1} parent=5 // pred_check
        _
      $region10: #{tpu_custom_call.1} parent=5 // pred_check_branch
        %137 = sbr.rel (%p134) target = $region12
      $region11: #{tpu_custom_call.1} parent=5 // pred_region
        %s138 = ssub.s32 %s17, 1
      $region12: #{tpu_custom_call.1} parent=5 // pred_fallthru
        _
      %p139 = scmp.lt.s32.totalorder %s17, 2
      // Predicated region
      $region13: #{tpu_custom_call.1} parent=5 // pred_check
        %p140 = pneg %p139
      $region14: #{tpu_custom_call.1} parent=5 // pred_check_branch
        %142 = sbr.rel (%p140) target = $region16
      $region15: #{tpu_custom_call.1} parent=5 // pred_region
        // Predicated region
        $region17: #{tpu_custom_call.1} parent=15 // pred_check
          %p143 = pneg %p60
        $region18: #{tpu_custom_call.1} parent=15 // pred_check_branch
          %145 = sbr.rel (%p143) target = $region20
        $region19: #{tpu_custom_call.1} parent=15 // pred_region
          %s146 = sand.u32 %s50, 1
          %s147 = scalar_lea.sflag [#allocation3], %s146
          %s148 = sand.u32 %s50, 1
          %s149 = smul.addr %s148, 8
          %s150 = scalar_lea.vmem [#allocation2], %s149
          %s151 = sadd.s32 %s25, %s26
          %s152 = smul.u32 2, %s151
          %s154 = ssub.s32 128, 128
          %155 = vsyncadd %s147, %s154
          %s156 = smul.addr %s24, 2
          %s157 = sadd.s32 %s152, %s156
          %s158 = smul.addr %s157, 64
          %s159 = scalar_lea.hbm %s0, %s158
          %s161 = sshll.u32 %s150, 4
          %s162 = int_to_ptr.vmem [resolvable:$true] %s161
          %164 = dma.hbm_to_vmem [thread:$0]  %s159, 128, %s162, %s147
        $region20: #{tpu_custom_call.1} parent=15 // pred_fallthru
          _
        // Predicated region
        $region21: #{tpu_custom_call.1} parent=15 // pred_check
          %p165 = pneg %p90
        $region22: #{tpu_custom_call.1} parent=15 // pred_check_branch
          %167 = sbr.rel (%p165) target = $region24
        $region23: #{tpu_custom_call.1} parent=15 // pred_region
          %s168 = sand.u32 %s80, 1
          %s169 = scalar_lea.sflag [#allocation6], %s168
          %s170 = sand.u32 %s80, 1
          %s171 = smul.addr %s170, 2
          %s172 = scalar_lea.vmem [#allocation5], %s171
          %s173 = sadd.s32 %s25, %s26
          %s174 = smul.u32 2, %s173
          %s176 = ssub.s32 32, 32
          %177 = vsyncadd %s169, %s176
          %s178 = smul.addr %s24, 2
          %s179 = sadd.s32 %s174, %s178
          %s180 = smul.addr %s179, 16
          %s181 = scalar_lea.hbm %s1, %s180
          %s183 = sshll.u32 %s172, 4
          %s184 = int_to_ptr.vmem [resolvable:$true] %s183
          %186 = dma.hbm_to_vmem [thread:$0]  %s181, 32, %s184, %s169
        $region24: #{tpu_custom_call.1} parent=15 // pred_fallthru
          _
      $region16: #{tpu_custom_call.1} parent=5 // pred_fallthru
        _
      %p187 = scmp.le.s32.totalorder 1, %s17
      %p188 = scmp.lt.s32.totalorder %s17, 3
      %p189 = pnand %p187, %p188
      %p190 = pneg %p189
      // Predicated region
      $region25: #{tpu_custom_call.1} parent=5 // pred_check
        _
      $region26: #{tpu_custom_call.1} parent=5 // pred_check_branch
        %192 = sbr.rel (%p189) target = $region28
      $region27: #{tpu_custom_call.1} parent=5 // pred_region
        %s193 = ssub.s32 %s17, 1
        %s194 = sand.u32 %s53, 1
        %s195 = scalar_lea.sflag [#allocation3], %s194
        %s196 = sand.u32 %s53, 1
        %s197 = smul.addr %s196, 8
        %s198 = scalar_lea.vmem [#allocation2], %s197
        // Predicated region
        $region29: #{tpu_custom_call.1} parent=27 // pred_check
          %p199 = pneg %p66
        $region30: #{tpu_custom_call.1} parent=27 // pred_check_branch
          %201 = sbr.rel (%p199) target = $region32
        $region31: #{tpu_custom_call.1} parent=27 // pred_region
          %202 = dma.done %s195, 128
        $region32: #{tpu_custom_call.1} parent=27 // pred_fallthru
          _
        %s203 = sand.u32 %s83, 1
        %s204 = scalar_lea.sflag [#allocation6], %s203
        %s205 = sand.u32 %s83, 1
        %s206 = smul.addr %s205, 2
        %s207 = scalar_lea.vmem [#allocation5], %s206
        // Predicated region
        $region33: #{tpu_custom_call.1} parent=27 // pred_check
          %p208 = pneg %p96
        $region34: #{tpu_custom_call.1} parent=27 // pred_check_branch
          %210 = sbr.rel (%p208) target = $region36
        $region35: #{tpu_custom_call.1} parent=27 // pred_region
          %211 = dma.done %s204, 32
        $region36: #{tpu_custom_call.1} parent=27 // pred_fallthru
          _
        %s212 = sand.u32 %s53, 1
        %s213 = scalar_lea.sflag [#allocation3], %s212
        %s214 = sand.u32 %s53, 1
        %s215 = smul.addr %s214, 8
        %s216 = scalar_lea.vmem [#allocation2], %s215
        %p217 = pneg %p66
        %p218 = pneg %p63
        %s219 = sand.u32 %s83, 1
        %s220 = scalar_lea.sflag [#allocation6], %s219
        %s221 = sand.u32 %s83, 1
        %s222 = smul.addr %s221, 2
        %s223 = scalar_lea.vmem [#allocation5], %s222
        %p224 = pneg %p96
        %p225 = pneg %p93
        %p226 = pneg %p124
        %p227 = pneg %p121
        %s228 = sand.u32 %s111, 1
        %s229 = scalar_lea.sflag [#allocation4], %s228
        %s230 = sand.u32 %s111, 1
        %s231 = smul.addr %s230, 4
        %s232 = scalar_lea.vmem [#allocation7], %s231
        %s233 = sadd.s32 %s28, %s29
        %s234 = smul.u32 2, %s233
        %s235 = sadd.s32 %s28, %s29
        %s236 = smul.u32 2, %s235
        %p237 = scmp.eq.s32.totalorder %s29, 0
        // Predicated region
        $region37: #{tpu_custom_call.1} parent=27 // pred_check
          %p238 = pneg %p237
        $region38: #{tpu_custom_call.1} parent=27 // pred_check_branch
          %240 = sbr.rel (%p238) target = $region40
        $region39: #{tpu_custom_call.1} parent=27 // pred_region
          %241 = vst [vmem:[%s232] sm:$0xf] 0.0
        $region40: #{tpu_custom_call.1} parent=27 // pred_fallthru
          _
        %v242 = vld [vmem:[%s198] sm:$0xff]
        %v243 = vld [vmem:[%s207] sm:$0x3]
        %v245 = vcombine.high %v242, %v242
        %vm247 = vcmask 1043456
        %v248 = vsel %vm247, %v242, -inf
        %v249 = vrot.slane %v248, 4
        %v250 = vmax.f32 %v248, %v249
        %v251 = vrot.slane %v250, 2
        %v252 = vmax.f32 %v250, %v251
        %v253 = vrot.slane %v252, 1
        %v254 = vmax.f32 %v252, %v253
        %v255 = vsel %vm247, %v245, -inf
        %v256 = vrot.slane %v255, 4
        %v257 = vmax.f32 %v255, %v256
        %v258 = vrot.slane %v257, 2
        %v259 = vmax.f32 %v257, %v258
        %v260 = vrot.slane %v259, 1
        %v261 = vmax.f32 %v259, %v260
        %v264 = vcombine.low %v254, %v261
        %v266 = vsub.f32 %v242, %v264
        %v267 = vmul.f32 %v266, 1.442695
        %v268 = vpow.pop %v267
        %v270 = vcombine.high %v268, %v268
        %v272 = vsel %vm247, %v268, 0.0
        %v273 = vrot.slane %v272, 4
        %v274 = vadd.f32 %v272, %v273
        %v275 = vrot.slane %v274, 2
        %v276 = vadd.f32 %v274, %v275
        %v277 = vrot.slane %v276, 1
        %v278 = vadd.f32 %v276, %v277
        %v279 = vsel %vm247, %v270, 0.0
        %v280 = vrot.slane %v279, 4
        %v281 = vadd.f32 %v279, %v280
        %v282 = vrot.slane %v281, 2
        %v283 = vadd.f32 %v281, %v282
        %v284 = vrot.slane %v283, 1
        %v285 = vadd.f32 %v283, %v284
        %v286 = vrcp.pop %v278
        %v287 = vrcp.pop %v285
        %v290 = vcombine.low %v286, %v287
        %v292 = vmul.f32 %v268, %v290
        %v293 = vlaneseq
        %v294 = vshrl.u32 %v293, 7
        %v295 = vlaneseq
        %v296 = vshrl.u32 %v295, 7
        %v297 = vsub.s32 0, %v296
        %v298 = vrot.slane %v243, %v297
        %v299 = vlaneseq
        %v300 = vshrl.u32 %v299, 7
        %v301 = vsub.s32 1, %v300
        %v302 = vrot.slane %v243, %v301
        %vm303 = vcmp.eq.s32.totalorder %v298, %v294
        %vm304 = vcmp.eq.s32.totalorder %v302, %v294
        %v305 = vsel %vm303, 1.0, 0.0
        %v306 = vsel %vm304, 1.0, 0.0
        %v309 = vcombine.low %v305, %v306
        %v311 = vmul.f32 %v292, %v309
        %v313 = vcombine.high %v311, %v311
        %v315 = vsel %vm247, %v311, 0.0
        %v316 = vsel %vm247, %v313, 0.0
        %v317 = vadd.f32 %v315, %v316
        %318 = vadd.xlane.f32.xlu0 %v317
        %v319 = vpop.xlane.xlu0 %318
        %v321 = vcombine.high %v292, %v292
        %v323 = vsel %vm247, %v292, 0.0
        %v324 = vsel %vm247, %v321, 0.0
        %v325 = vadd.f32 %v323, %v324
        %326 = vadd.xlane.f32.xlu0 %v325
        %v327 = vpop.xlane.xlu0 %326
        %v328 = vsel %vm247, %v305, 0.0
        %v329 = vsel %vm247, %v306, 0.0
        %v330 = vadd.f32 %v328, %v329
        %331 = vadd.xlane.f32.xlu0 %v330
        %v332 = vpop.xlane.xlu0 %331
        %v333 = vlaneseq
        %v334 = vand.u32 %v333, 127
        %vm335 = vcmp.eq.s32.totalorder %v334, 0
        %v336 = vsel %vm335, %v319, 0.0
        %vm337 = vcmp.eq.s32.totalorder %v334, 1
        %v338 = vsel %vm337, %v327, 0.0
        %v339 = vadd.f32 %v336, %v338
        %vm340 = vcmp.eq.s32.totalorder %v334, 2
        %v341 = vsel %vm340, %v332, 0.0
        %v342 = vadd.f32 %v339, %v341
        %v343 = vld [vmem:[%s232] sm:$0xf]
        %v344 = vadd.f32 %v343, %v342
        %345 = vst [vmem:[%s232] sm:$0xf] %v344
        %s346 = sand.u32 %s111, 1
        %s347 = scalar_lea.sflag [#allocation4], %s346
        %s348 = sand.u32 %s111, 1
        %s349 = smul.addr %s348, 4
        %s350 = scalar_lea.vmem [#allocation7], %s349
        // Predicated region
        $region41: #{tpu_custom_call.1} parent=27 // pred_check
          %p351 = pneg %p121
        $region42: #{tpu_custom_call.1} parent=27 // pred_check_branch
          %353 = sbr.rel (%p351) target = $region44
        $region43: #{tpu_custom_call.1} parent=27 // pred_region
          %s355 = ssub.s32 64, 64
          %356 = vsyncadd %s347, %s355
          %s357 = sadd.s32 %s28, %s27
          %s358 = smul.addr %s357, 64
          %s359 = scalar_lea.hbm %s2, %s358
          %s361 = sshll.u32 %s350, 4
          %s362 = int_to_ptr.vmem [resolvable:$true] %s361
          %364 = dma.vmem_to_hbm [thread:$0]  %s362, 64, %s359, %s347
        $region44: #{tpu_custom_call.1} parent=27 // pred_fallthru
          _
      $region28: #{tpu_custom_call.1} parent=5 // pred_fallthru
        _
      %p365 = scmp.le.s32.totalorder 2, %s17
      // Predicated region
      $region45: #{tpu_custom_call.1} parent=5 // pred_check
        %p366 = pneg %p365
      $region46: #{tpu_custom_call.1} parent=5 // pred_check_branch
        %368 = sbr.rel (%p366) target = $region48
      $region47: #{tpu_custom_call.1} parent=5 // pred_region
        %s369 = ssub.s32 %s17, 2
        // Predicated region
        $region49: #{tpu_custom_call.1} parent=47 // pred_check
          %p370 = pneg %p127
        $region50: #{tpu_custom_call.1} parent=47 // pred_check_branch
          %372 = sbr.rel (%p370) target = $region52
        $region51: #{tpu_custom_call.1} parent=47 // pred_region
          %s373 = sand.u32 %s112, 1
          %s374 = scalar_lea.sflag [#allocation4], %s373
          %s375 = sand.u32 %s112, 1
          %s376 = smul.addr %s375, 4
          %s377 = scalar_lea.vmem [#allocation7], %s376
          %378 = dma.done %s374, 64
        $region52: #{tpu_custom_call.1} parent=47 // pred_fallthru
          _
      $region48: #{tpu_custom_call.1} parent=5 // pred_fallthru
        _
    $region6: #{tpu_custom_call.1} parent=1 // loop_footer
      %s21 = sadd.s32 1, %s17
    $region7: #{tpu_custom_call.1} parent=1 // loop_footer_branch
      %16 = sbr.rel target = $region3
    $region8: #{tpu_custom_call.1} parent=1 // loop_exit
      _
    %379 = vsyncpa [#allocation3], 1
    %s380 = scalar_lea.sflag [#allocation3], 1
    %381 = vsyncpa %s380, 1
    %382 = vsyncpa [#allocation6], 1
    %s383 = scalar_lea.sflag [#allocation6], 1
    %384 = vsyncpa %s383, 1
    %385 = vsyncpa [#allocation4], 1
    %s386 = scalar_lea.sflag [#allocation4], 1
    %387 = vsyncpa %s386, 1

</llo_original>
